<compile_context>
chip_gen: v5e
topology: v5e:2x2
jax: 0.10.0
libtpu: 0.0.40
codegen_flags: <defaults>
</compile_context>

<pallas_src>
import functools

import numpy as np
import jax
import jax.numpy as jnp
from jax import lax
from jax.experimental import pallas as pl
from jax.experimental.pallas import tpu as pltpu


def _round_up(x, m):
    return (x + m - 1) // m * m


def _gram_kernel(feat_ref, gram_ref, avg_ref, *, n, c, num_d, steps, has_tail):
    """Accumulate the (n, n) gram of per-group feature SUMS for this core's
    slice of the D axis.  gram_ref is the (1, n, n) output block (resident
    accumulator across the 'arbitrary' d axis)."""
    p = pl.program_id(0)          # core-split index ("parallel")
    d = pl.program_id(1)          # D-tile index     ("arbitrary")
    b_pad = feat_ref.shape[0]

    @pl.when(d == 0)
    def _init():
        gram_ref[...] = jnp.zeros_like(gram_ref)
        # Static one-hot group-sum matrix A (n, B): A[g, b] = 1 iff row b
        # belongs to group g.  Built once per core, reused every d step.
        grp = lax.broadcasted_iota(jnp.int32, (n, b_pad), 0)
        col = lax.broadcasted_iota(jnp.int32, (n, b_pad), 1)
        one_hot = (col >= grp * c) & (col < (grp + 1) * c)
        avg_ref[...] = one_hot.astype(avg_ref.dtype)

    def _accum():
        chunk = feat_ref[...]                                   # (B, tile_d), native dtype
        # Group sums on the MXU (bf16 or f32 input, f32 accumulation).
        sums = lax.dot_general(
            avg_ref[...], chunk,
            dimension_numbers=(((1,), (0,)), ((), ())),
            preferred_element_type=jnp.float32)                 # (n, tile_d) f32
        # Partial gram of sums: sums @ sums.T without materializing a transpose.
        part = lax.dot_general(
            sums, sums,
            dimension_numbers=(((1,), (1,)), ((), ())),
            preferred_element_type=jnp.float32)                 # (n, n) f32
        gram_ref[...] += part[None, :, :]

    if has_tail:
        # Odd number of D tiles: the very last step of the last core is a
        # (clamped) duplicate fetch -- skip its contribution.
        pl.when(p * steps + d < num_d)(_accum)
    else:
        _accum()


def _loss_from_gram_kernel(gram_parts_ref, loss_ref, correct_ref, *,
                           margin, label_num, inv_c2):
    """Tiny epilogue: combine per-core partial grams, build distances,
    hardest positive / negative, margin-ranking loss and the correct count."""
    n = 2 * label_num
    gram = jnp.sum(gram_parts_ref[...], axis=0) * jnp.float32(inv_c2)   # (n, n)

    row = lax.broadcasted_iota(jnp.int32, (n, n), 0)
    col = lax.broadcasted_iota(jnp.int32, (n, n), 1)
    eye = row == col

    # ||x_i||^2 from the gram diagonal, as both column and row vectors
    # (reduce the masked gram along both axes -> no (n, 1) transpose).
    diag = jnp.where(eye, gram, 0.0)
    sq_col = jnp.sum(diag, axis=1, keepdims=True)               # (n, 1)
    sq_row = jnp.sum(diag, axis=0, keepdims=True)               # (1, n)
    dist2 = jnp.maximum(sq_col + sq_row - 2.0 * gram, jnp.float32(1e-12))

    # Structural same-label mask: targets = [uniq, uniq] (same as torch).
    mask = eye | (row == col + label_num) | (col == row + label_num)

    neg_inf = jnp.float32(-jnp.inf)
    pos_inf = jnp.float32(jnp.inf)
    ap2 = jnp.max(jnp.where(mask, dist2, neg_inf), axis=1, keepdims=True)
    an2 = jnp.min(jnp.where(mask, pos_inf, dist2), axis=1, keepdims=True)
    # sqrt only on the 2n selected values (max/min commute with sqrt).
    dist_ap = jnp.sqrt(ap2)
    dist_an = jnp.sqrt(an2)

    # MarginRankingLoss(margin)(dist_an, dist_ap, y=1) = mean(relu(ap - an + m))
    per = jnp.maximum(dist_ap - dist_an + jnp.float32(margin), 0.0)
    loss_ref[...] = jnp.sum(per, axis=(0, 1), keepdims=True) / jnp.float32(n)
    correct_ref[...] = jnp.sum((dist_an >= dist_ap).astype(jnp.int32),
                               axis=(0, 1), keepdims=True)


def _choose_tile_d(rows_padded, d_pad, itemsize, max_block_bytes):
    """Largest multiple-of-128 tile that divides d_pad and keeps one input
    block <= max_block_bytes (falls back to 128, which always divides d_pad)."""
    if rows_padded * d_pad * itemsize <= max_block_bytes:
        return d_pad
    per_lane = rows_padded * itemsize
    max_lanes = max(128, (max_block_bytes // per_lane) // 128 * 128)
    t = min(int(max_lanes), d_pad)
    t -= t % 128
    t = max(t, 128)
    while t > 128 and d_pad % t != 0:
        t -= 128
    return t if d_pad % t == 0 else 128


def center_triplet_loss(feats, labels, margin=0.3,
                        max_block_bytes=6 * 1024 * 1024):
    """Pallas TPU implementation of CenterTripletLoss.forward.

    Returns (loss, correct) as device scalars; call int(correct) if the
    PyTorch `.item()` host-sync behaviour is really needed.
    """
    # TODO(synk): torch.unique() is data-dependent; labels must be concrete on
    # host because label_num fixes the chunking and all grid/block shapes.
    labels_np = np.asarray(labels)
    label_num = int(np.unique(labels_np).shape[0])
    if label_num < 2:
        raise ValueError("CenterTripletLoss needs >= 2 distinct labels "
                         "(otherwise there are no negative pairs).")
    n = 2 * label_num

    feats = jnp.asarray(feats)
    if feats.dtype not in (jnp.float32, jnp.bfloat16):
        feats = feats.astype(jnp.float32)
    B, D = feats.shape
    if B % n != 0:
        raise ValueError("batch must split evenly into 2*label_num chunks")
    c = B // n

    # Zero-pad rows to a multiple of 8 and the feature dim to a multiple of
    # 128: padded rows are excluded by the one-hot matrix and padded columns
    # contribute 0 to the gram, so results are unchanged.
    B_pad = _round_up(B, 8)
    D_pad = _round_up(D, 128)
    if (B_pad, D_pad) != (B, D):
        feats = jnp.pad(feats, ((0, B_pad - B), (0, D_pad - D)))

    itemsize = jnp.dtype(feats.dtype).itemsize
    sublane = 32 // itemsize                      # 8 for f32, 16 for bf16
    rows_padded = _round_up(B_pad, sublane)       # real VMEM footprint rows

    tile_d = _choose_tile_d(rows_padded, D_pad, itemsize, max_block_bytes)
    num_d = D_pad // tile_d
    split = 2 if num_d >= 2 else 1                # v7x: one slice per TensorCore
    steps = pl.cdiv(num_d, split)
    has_tail = split * steps != num_d

    if has_tail:
        in_idx = lambda p, d: (0, jnp.minimum(p * steps + d, num_d - 1))
    else:
        in_idx = lambda p, d: (0, p * steps + d)

    # VMEM budget with sublane padding accounted for: 2x double-buffered input
    # blocks + double-buffered (1, n, n) output block + one-hot scratch + slack.
    block_bytes = rows_padded * tile_d * itemsize
    out_bytes = _round_up(n, 8) * _round_up(n, 128) * 4
    avg_bytes = _round_up(n, sublane) * _round_up(B_pad, 128) * itemsize
    vmem_need = 2 * block_bytes + 2 * out_bytes + avg_bytes + (1 << 20)
    cp_kwargs = dict(dimension_semantics=("parallel", "arbitrary"))
    if vmem_need > 15 * 1024 * 1024:
        # Only reachable for enormous B; stay well below v7x's 64 MiB VMEM.
        cp_kwargs["vmem_limit_bytes"] = int(min(vmem_need, 40 * 1024 * 1024))

    # TODO(synk): when num_d == 1 the single input block is still
    # double-buffered (pl.Buffered(1) would save one block of VMEM); left at
    # the default for compile robustness -- the block is <= max_block_bytes.
    gram_parts = pl.pallas_call(
        functools.partial(_gram_kernel, n=n, c=c, num_d=num_d, steps=steps,
                          has_tail=has_tail),
        out_shape=jax.ShapeDtypeStruct((split, n, n), jnp.float32),
        grid_spec=pltpu.PrefetchScalarGridSpec(
            num_scalar_prefetch=0,
            grid=(split, steps),
            in_specs=[pl.BlockSpec((B_pad, tile_d), in_idx)],
            out_specs=pl.BlockSpec((1, n, n), lambda p, d: (p, 0, 0)),
            scratch_shapes=[pltpu.VMEM((n, B_pad), feats.dtype)]),
        compiler_params=pltpu.CompilerParams(**cp_kwargs),
    )(feats)

    # Tiny grid-less epilogue kernel: combine partial grams and finish the
    # distance / hardest pos-neg / margin-ranking math on-chip.
    loss, correct = pl.pallas_call(
        functools.partial(_loss_from_gram_kernel, margin=float(margin),
                          label_num=label_num, inv_c2=1.0 / float(c * c)),
        out_shape=(jax.ShapeDtypeStruct((1, 1), jnp.float32),
                   jax.ShapeDtypeStruct((1, 1), jnp.int32)),
    )(gram_parts)
    return loss[0, 0], correct[0, 0]


def _reference(feats, labels, margin=0.3):
    """Pure numpy reference mirroring the torch code."""
    feats = np.asarray(feats, dtype=np.float64)
    labels = np.asarray(labels)
    label_uni = np.unique(labels)
    n = 2 * len(label_uni)
    targets = np.concatenate([label_uni, label_uni])
    chunks = np.split(feats, n, axis=0)
    inputs = np.stack([ch.mean(axis=0) for ch in chunks])
    sq = (inputs ** 2).sum(axis=1, keepdims=True)
    dist = np.sqrt(np.clip(sq + sq.T - 2.0 * inputs @ inputs.T, 1e-12, None))
    mask = targets[:, None] == targets[None, :]
    dist_ap = np.array([dist[i][mask[i]].max() for i in range(n)])
    dist_an = np.array([dist[i][~mask[i]].min() for i in range(n)])
    loss = np.maximum(dist_ap - dist_an + margin, 0.0).mean()
    correct = int((dist_an >= dist_ap).sum())
    return loss, correct


if __name__ == "__main__":
    key = jax.random.PRNGKey(0)
    k1, k2, k3 = jax.random.split(key, 3)

    # 4 identities, 2 samples per center per modality -> batch 16.
    label_num, per_center = 4, 2
    B = 2 * label_num * per_center
    ids = np.repeat(np.arange(label_num, dtype=np.int32), per_center)
    labels = jnp.asarray(np.concatenate([ids, ids]))            # (16,)

    # Case 1: D = 32 (zero-padded to one 128-lane tile, single slice).
    feats = jax.random.normal(k1, (B, 32), dtype=jnp.float32)
    loss, correct = center_triplet_loss(feats, labels, margin=0.3)
    jax.block_until_ready(loss)
    ref_loss, ref_correct = _reference(np.asarray(feats), np.asarray(labels), 0.3)
    assert abs(float(loss) - ref_loss) < 1e-4, (float(loss), ref_loss)
    assert int(correct) == ref_correct, (int(correct), ref_correct)

    # Case 2: D = 256 forced into two 128-lane tiles -> 2-way core split,
    # one D tile per slice (exercises the (split, n, n) partial-gram path).
    feats2 = jax.random.normal(k2, (B, 256), dtype=jnp.float32)
    loss2, correct2 = center_triplet_loss(feats2, labels, margin=0.3,
                                          max_block_bytes=8 * 1024)
    jax.block_until_ready(loss2)
    ref_loss2, ref_correct2 = _reference(np.asarray(feats2), np.asarray(labels), 0.3)
    assert abs(float(loss2) - ref_loss2) < 1e-4, (float(loss2), ref_loss2)
    assert int(correct2) == ref_correct2, (int(correct2), ref_correct2)

    # Case 3: D = 384 -> 3 tiles (odd), exercises the clamped tail step.
    feats3 = jax.random.normal(k3, (B, 384), dtype=jnp.float32)
    loss3, correct3 = center_triplet_loss(feats3, labels, margin=0.3,
                                          max_block_bytes=8 * 1024)
    jax.block_until_ready(loss3)
    ref_loss3, ref_correct3 = _reference(np.asarray(feats3), np.asarray(labels), 0.3)
    assert abs(float(loss3) - ref_loss3) < 1e-4, (float(loss3), ref_loss3)
    assert int(correct3) == ref_correct3, (int(correct3), ref_correct3)

    # Case 4: producer already emits bf16 -> streamed natively into the MXU
    # (no wrapper cast, no in-kernel upcast); compare against the reference on
    # the bf16-quantized inputs.
    feats_bf16 = feats2.astype(jnp.bfloat16)
    loss_bf16, correct_bf16 = center_triplet_loss(feats_bf16, labels, margin=0.3,
                                                  max_block_bytes=8 * 1024)
    jax.block_until_ready(loss_bf16)
    ref_loss_bf, ref_correct_bf = _reference(
        np.asarray(feats_bf16.astype(jnp.float32)), np.asarray(labels), 0.3)
    assert abs(float(loss_bf16) - ref_loss_bf) < 1e-2, (float(loss_bf16), ref_loss_bf)
    assert int(correct_bf16) == ref_correct_bf, (int(correct_bf16), ref_correct_bf)

    print("KERNEL_OK")
</pallas_src>

<mosaic_0001>
module attributes {stable_mosaic.version = 11 : i64} {
  func.func @_gram_kernel(%arg0: i32, %arg1: i32, %arg2: memref<16x128xf32, #tpu.memory_space<vmem>>, %arg3: memref<1x8x8xf32, #tpu.memory_space<vmem>>, %arg4: memref<8x16xf32, #tpu.memory_space<vmem>>) attributes {dimension_semantics = [#tpu.dimension_semantics<parallel>, #tpu.dimension_semantics<arbitrary>], iteration_bounds = array<i64: 1, 1>, scalar_prefetch = 0 : i64, scratch_operands = 1 : i64, tpu.core_type = #tpu.core_type<tc>, window_params = [{transform_indices = @transform_0, window_bounds = array<i64: 16, 128>}, {transform_indices = @transform_1, window_bounds = array<i64: 1, 8, 8>}]} {
    %c0_i32 = arith.constant 0 : i32
    %0 = arith.cmpi eq, %arg1, %c0_i32 : i32
    %1 = arith.extui %0 : i1 to i32
    %c0_i32_0 = arith.constant 0 : i32
    %2 = arith.cmpi ne, %1, %c0_i32_0 : i32
    scf.if %2 {
      %cst_11 = arith.constant 0.000000e+00 : f32
      %11 = vector.broadcast %cst_11 : f32 to vector<1x8x8xf32>
      %c0_12 = arith.constant 0 : index
      %c0_13 = arith.constant 0 : index
      %c0_14 = arith.constant 0 : index
      %12 = vector.load %arg3[%c0_12, %c0_13, %c0_14] : memref<1x8x8xf32, #tpu.memory_space<vmem>>, vector<1x8x8xf32>
      tpu.vector_store %arg3[%c0_12, %c0_13, %c0_14], %11 {strides = array<i32>} : memref<1x8x8xf32, #tpu.memory_space<vmem>>, vector<1x8x8xf32>,
      %13 = tpu.iota {dimensions = array<i32: 0>} : vector<8x16xi32>
      %14 = tpu.iota {dimensions = array<i32: 1>} : vector<8x16xi32>
      %c2_i32 = arith.constant 2 : i32
      %15 = vector.broadcast %c2_i32 : i32 to vector<8x16xi32>
      %16 = arith.muli %13, %15 : vector<8x16xi32>
      %17 = arith.cmpi sge, %14, %16 : vector<8x16xi32>
      %c1_i32 = arith.constant 1 : i32
      %18 = vector.broadcast %c1_i32 : i32 to vector<8x16xi32>
      %19 = arith.addi %13, %18 : vector<8x16xi32>
      %c2_i32_15 = arith.constant 2 : i32
      %20 = vector.broadcast %c2_i32_15 : i32 to vector<8x16xi32>
      %21 = arith.muli %19, %20 : vector<8x16xi32>
      %22 = arith.cmpi slt, %14, %21 : vector<8x16xi32>
      %23 = arith.andi %17, %22 : vector<8x16xi1>
      %24 = arith.extui %23 : vector<8x16xi1> to vector<8x16xi32>
      %25 = arith.sitofp %24 : vector<8x16xi32> to vector<8x16xf32>
      %c0_16 = arith.constant 0 : index
      %c0_17 = arith.constant 0 : index
      %26 = vector.load %arg4[%c0_16, %c0_17] : memref<8x16xf32, #tpu.memory_space<vmem>>, vector<8x16xf32>
      tpu.vector_store %arg4[%c0_16, %c0_17], %25 {strides = array<i32>} : memref<8x16xf32, #tpu.memory_space<vmem>>, vector<8x16xf32>,
    } else {
    }
    %c0 = arith.constant 0 : index
    %c0_1 = arith.constant 0 : index
    %3 = vector.load %arg2[%c0, %c0_1] : memref<16x128xf32, #tpu.memory_space<vmem>>, vector<16x128xf32>
    %c0_2 = arith.constant 0 : index
    %c0_3 = arith.constant 0 : index
    %4 = vector.load %arg4[%c0_2, %c0_3] : memref<8x16xf32, #tpu.memory_space<vmem>>, vector<8x16xf32>
    %cst = arith.constant dense<0.000000e+00> : vector<8x128xf32>
    %5 = tpu.matmul %4, %3, %cst {dimension_numbers = #tpu.dot_dimension_numbers<[1], [0], [0], [1], [0, 0, 1, 1], [], []>} : vector<8x16xf32>, vector<16x128xf32>, vector<8x128xf32> -> vector<8x128xf32>
    %cst_4 = arith.constant dense<0.000000e+00> : vector<8x8xf32>
    %6 = tpu.matmul %5, %5, %cst_4 {dimension_numbers = #tpu.dot_dimension_numbers<[1], [1], [0], [0], [0, 0, 1, 0], [], []>} : vector<8x128xf32>, vector<8x128xf32>, vector<8x8xf32> -> vector<8x8xf32>
    %c0_5 = arith.constant 0 : index
    %c0_6 = arith.constant 0 : index
    %c0_7 = arith.constant 0 : index
    %7 = vector.load %arg3[%c0_5, %c0_6, %c0_7] : memref<1x8x8xf32, #tpu.memory_space<vmem>>, vector<1x8x8xf32>
    %8 = vector.shape_cast %6 : vector<8x8xf32> to vector<1x8x8xf32>
    %9 = arith.addf %7, %8 : vector<1x8x8xf32>
    %c0_8 = arith.constant 0 : index
    %c0_9 = arith.constant 0 : index
    %c0_10 = arith.constant 0 : index
    %10 = vector.load %arg3[%c0_8, %c0_9, %c0_10] : memref<1x8x8xf32, #tpu.memory_space<vmem>>, vector<1x8x8xf32>
    tpu.vector_store %arg3[%c0_8, %c0_9, %c0_10], %9 {strides = array<i32>} : memref<1x8x8xf32, #tpu.memory_space<vmem>>, vector<1x8x8xf32>,
    return
  }
  func.func @transform_0(%arg0: i32, %arg1: i32) -> (i32, i32) {
    %c1_i32 = arith.constant 1 : i32
    %0 = arith.muli %arg0, %c1_i32 : i32
    %1 = arith.addi %0, %arg1 : i32
    %c0_i32 = arith.constant 0 : i32
    %c0_i32_0 = arith.constant 0 : i32
    return %c0_i32, %1 : i32, i32
  }
  func.func @transform_1(%arg0: i32, %arg1: i32) -> (i32, i32, i32) {
    %c0_i32 = arith.constant 0 : i32
    %c0_i32_0 = arith.constant 0 : i32
    %c0_i32_1 = arith.constant 0 : i32
    return %arg0, %c0_i32, %c0_i32_0 : i32, i32, i32
  }
}

</mosaic_0001>

<llo_original>
// kernel: tpu_custom_call.1
$region0: #{tpu_custom_call.1}
  #allocation0 [shape = 'u32[]', space=smem, size = 0x4, offset = 0x4, fixed_abs, tag = 'smem constant byte address 0x4 - core index']
  #allocation1 [shape = 'u32[72,128]{1,0:T(1,128)}', space=vmem, size = 0x9000, scoped, tag = 'internal scratch']
  #allocation2 [shape = 'f32[8,16]{1,0:T(8,128)}', space=vmem, size = 0x1000, scoped, tag = 'scratch operand']
  %s0 = inlined_call_operand.hbm [shape: f32[16,128], index: 0, kind: input, shape index: {}]
  %s1 = inlined_call_operand.hbm [shape: f32[1,8,8], index: 1, kind: output, shape index: {}]
  %s2 = sld [smem:[#allocation0]]
  $region22: #{tpu_custom_call.1} parent=0
    _
  %s4 = ssub.s32 1, %s2
  %s5 = scalar_select 0, %s4, %s2
  $region1: #{tpu_custom_call.1} parent=0
    #allocation3 [shape = 'u8[8192]{0}', space=vmem, size = 0x2000, scoped, tag = 'input window, operand 0, single buffered']
    #allocation4 [shape = 's32[1]{0}', space=sflag, size = 0x4, scoped, tag = 'scoped memory for tpu_custom_call.1']
    #allocation5 [shape = 's32[1]{0}', space=sflag, size = 0x4, scoped, tag = 'scoped memory for tpu_custom_call.1']
    #allocation6 [shape = 'u8[4096]{0}', space=vmem, size = 0x1000, scoped, tag = 'output window, operand 0, single buffered']
    %6 = vsyncpa [#allocation4], 0
    %7 = vsyncpa [#allocation5], 0
    // Predicated region
    $region2: #{tpu_custom_call.1} parent=1 // pred_check
      _
    $region3: #{tpu_custom_call.1} parent=1 // pred_check_branch
      %9 = sbr.rel (0) target = $region5
    $region4: #{tpu_custom_call.1} parent=1 // pred_region
      %s10 = sadd.s32 0, 0
      %12 = vsyncadd [#allocation4], 0
      %s13 = smul.addr %s10, 8
      %s14 = scalar_lea.hbm %s0, %s13
      %s15 = sshll.u32 %s14, 4
      %s16 = int_to_ptr.hbm [resolvable:$true] %s15
      %s17 = sshll.u32 [#allocation3], 4
      %s18 = int_to_ptr.vmem [resolvable:$true] %s17
      %23 = dma.hbm_to_vmem [thread:$0]  %s16, 256, %s18, [#allocation4], 128, 128, 8
    $region5: #{tpu_custom_call.1} parent=1 // pred_fallthru
      _
    // Predicated region
    $region6: #{tpu_custom_call.1} parent=1 // pred_check
      _
    $region7: #{tpu_custom_call.1} parent=1 // pred_check_branch
      %25 = sbr.rel (0) target = $region9
    $region8: #{tpu_custom_call.1} parent=1 // pred_region
      %27 = dma.done [#allocation4], 256
    $region9: #{tpu_custom_call.1} parent=1 // pred_fallthru
      _
    %s28 = sadd.s32 0, 0
    %p29 = scmp.eq.s32.totalorder 0, 0
    // Predicated region
    $region10: #{tpu_custom_call.1} parent=1 // pred_check
      %p30 = pneg %p29
    $region11: #{tpu_custom_call.1} parent=1 // pred_check_branch
      %32 = sbr.rel (%p30) target = $region13
    $region12: #{tpu_custom_call.1} parent=1 // pred_region
      %vm33 = vcmask 64512
      %34 = vst.msk [vmem:[#allocation6] sm:$0xff] %vm33, 0.0
      %v35 = vlaneseq
      %v36 = vshrl.u32 %v35, 7
      %v37 = vlaneseq
      %v38 = vand.u32 %v37, 127
      %v39 = vmul.u32 %v36, 2
      %vm40 = vcmp.ge.s32.totalorder %v38, %v39
      %v41 = vadd.s32 %v36, 1
      %v42 = vmul.u32 %v41, 2
      %vm43 = vcmp.lt.s32.totalorder %v38, %v42
      %vm44 = vmand %vm40, %vm43
      %v45 = vsel %vm44, 1, 0
      %v46 = vcvt.s32.f32 %v45
      %vm47 = vcmask 130048
      %48 = vst.msk [vmem:[#allocation2] sm:$0xff] %vm47, %v46
    $region13: #{tpu_custom_call.1} parent=1 // pred_fallthru
      _
    %v49 = vld [vmem:[#allocation3] sm:$0xff]
    %v50 = vld [vmem:[#allocation3 + $0x8] sm:$0xff]
    %v51 = vld [vmem:[#allocation2] sm:$0xff]
    %vm52 = vcmask 130048
    %v54 = vsel %vm52, %v51, 0
    %56 = vmatpush.msra.mxu0 0.0
    %57 = vmatpush.msra.mxu0 0.0
    %58 = vmatpush.msra.mxu0 0.0
    %59 = vmatpush.msra.mxu0 0.0
    %60 = vmatpush.msra.mxu0 0.0
    %61 = vmatpush.msra.mxu0 0.0
    %62 = vmatpush.msra.mxu0 0.0
    %63 = vmatpush.msra.mxu0 0.0
    %64 = vmatpush.msra.mxu0 0.0
    %65 = vmatpush.msra.mxu0 0.0
    %66 = vmatpush.msra.mxu0 0.0
    %67 = vmatpush.msra.mxu0 0.0
    %68 = vmatpush.msra.mxu0 0.0
    %69 = vmatpush.msra.mxu0 0.0
    %70 = vmatpush.msra.mxu0 %v50
    %71 = vmatpush.msra.mxu0 %v49
    %72 = vmatmul.f32.gmra.mxu0 %v54
    %v73 = vpop.f32.mrf.mxu0
    %v74 = vadd.f32 0.0, %v73
    %75 = vdwg.mxu0
    %76 = vmatpush.xpose.msra.mxu0 0.0
    %77 = vmatpush.xpose.msra.mxu0 0.0
    %78 = vmatpush.xpose.msra.mxu0 0.0
    %79 = vmatpush.xpose.msra.mxu0 0.0
    %80 = vmatpush.xpose.msra.mxu0 0.0
    %81 = vmatpush.xpose.msra.mxu0 0.0
    %82 = vmatpush.xpose.msra.mxu0 0.0
    %83 = vmatpush.xpose.msra.mxu0 0.0
    %84 = vmatpush.xpose.msra.mxu0 0.0
    %85 = vmatpush.xpose.msra.mxu0 0.0
    %86 = vmatpush.xpose.msra.mxu0 0.0
    %87 = vmatpush.xpose.msra.mxu0 0.0
    %88 = vmatpush.xpose.msra.mxu0 0.0
    %89 = vmatpush.xpose.msra.mxu0 0.0
    %90 = vmatpush.xpose.msra.mxu0 0.0
    %91 = vmatpush.xpose.msra.mxu0 %v74
    %92 = vmatmul.f32.gmra.mxu0 %v74
    %v93 = vpop.f32.mrf.mxu0
    %v94 = vadd.f32 0.0, %v93
    %95 = vdwg.mxu0
    %v96 = vld [vmem:[#allocation6] sm:$0xff]
    %v97 = vadd.f32 %v96, %v94
    %vm98 = vcmask 64512
    %99 = vst.msk [vmem:[#allocation6] sm:$0xff] %vm98, %v97
    // Predicated region
    $region14: #{tpu_custom_call.1} parent=1 // pred_check
      _
    $region15: #{tpu_custom_call.1} parent=1 // pred_check_branch
      %101 = sbr.rel (0) target = $region17
    $region16: #{tpu_custom_call.1} parent=1 // pred_region
      %103 = vsyncadd [#allocation5], 0
      %s105 = sshll.u32 [#allocation6], 4
      %s106 = int_to_ptr.vmem [resolvable:$true] %s105
      %s107 = sshll.u32 %s1, 4
      %s108 = int_to_ptr.hbm [resolvable:$true] %s107
      %110 = dma.vmem_to_hbm [thread:$0]  %s106, 128, %s108, [#allocation5]
    $region17: #{tpu_custom_call.1} parent=1 // pred_fallthru
      _
    // Predicated region
    $region18: #{tpu_custom_call.1} parent=1 // pred_check
      _
    $region19: #{tpu_custom_call.1} parent=1 // pred_check_branch
      %112 = sbr.rel (0) target = $region21
    $region20: #{tpu_custom_call.1} parent=1 // pred_region
      %114 = dma.done [#allocation5], 128
    $region21: #{tpu_custom_call.1} parent=1 // pred_fallthru
      _
    %115 = vsyncpa [#allocation4], 1
    %116 = vsyncpa [#allocation5], 1

</llo_original>
